<compile_context>
chip_gen: v7x
topology: tpu7x:2x2x1
jax: 0.10.0
libtpu: 0.0.40
codegen_flags: <defaults>
</compile_context>

<pallas_src>
import jax
import jax.numpy as jnp
from jax.experimental import pallas as pl
from jax.experimental.pallas import tpu as pltpu


def _osg_decoder_kernel(feats_ref, w1_ref, b1_ref, w2_ref, b2_ref, out_ref):
    # feats_ref: (P, TM, C)  bf16/f32      w1: (C, H) f32   b1: (1, H) f32
    # w2:        (H, D)  f32               b2: (1, D) f32
    # out_ref:   (TM, D) f32, D = 1 + decoder_output_dim
    x = jnp.mean(feats_ref[...].astype(jnp.float32), axis=0)            # (TM, C)
    h = jnp.dot(x, w1_ref[...], preferred_element_type=jnp.float32) + b1_ref[...]
    h = jnp.logaddexp(h, 0.0)                                            # Softplus
    y = jnp.dot(h, w2_ref[...], preferred_element_type=jnp.float32) + b2_ref[...]
    # channel 0 -> raw sigma; channels 1.. -> sigmoid * (1 + 2e-3) - 1e-3
    rgb = (1.0 / (1.0 + jnp.exp(-y))) * (1.0 + 2.0 * 0.001) - 0.001
    col = jax.lax.broadcasted_iota(jnp.int32, y.shape, 1)
    out_ref[...] = jnp.where(col == 0, y, rgb).astype(out_ref.dtype)


def osg_decoder_pallas(sampled_features, ray_directions, params, *, tm=1024):
    """sampled_features: (N, P, M, C) bf16 or f32; ray_directions unused (parity)."""
    del ray_directions
    N, P, M, C = sampled_features.shape
    w1, b1, w2, b2 = params["w1"], params["b1"], params["w2"], params["b2"]
    H = w1.shape[1]
    D = w2.shape[1]

    # Rows (samples) are independent. If M fits in one tile, use the exact extent
    # (block == full dim, no divisibility constraint). Otherwise keep a
    # sublane-aligned tile and let Pallas mask the ragged last block.
    if M <= tm:
        tm = M
    else:
        tm = max(8, (tm // 8) * 8)

    grid = (N, pl.cdiv(M, tm))

    feat_bytes = N * P * M * C * jnp.dtype(sampled_features.dtype).itemsize
    param_bytes = 4 * (C * H + H + H * D + D)
    out_bytes = N * M * D * 4
    cost = pl.CostEstimate(
        flops=2 * N * M * (C * H + H * D) + N * M * P * C,
        transcendentals=N * M * (H + (D - 1)),
        bytes_accessed=feat_bytes + param_bytes + out_bytes,
    )

    out = pl.pallas_call(
        _osg_decoder_kernel,
        out_shape=jax.ShapeDtypeStruct((N, M, D), jnp.float32),
        grid_spec=pltpu.PrefetchScalarGridSpec(
            num_scalar_prefetch=0,
            grid=grid,
            in_specs=[
                # batch dim squeezed -> kernel sees (P, tm, C); no host transpose/pad.
                pl.BlockSpec((None, P, tm, C), lambda n, i: (n, 0, i, 0)),
                pl.BlockSpec((C, H), lambda n, i: (0, 0)),
                pl.BlockSpec((1, H), lambda n, i: (0, 0)),
                pl.BlockSpec((H, D), lambda n, i: (0, 0)),
                pl.BlockSpec((1, D), lambda n, i: (0, 0)),
            ],
            out_specs=pl.BlockSpec((None, tm, D), lambda n, i: (n, i, 0)),
        ),
        compiler_params=pltpu.CompilerParams(
            dimension_semantics=("parallel", "parallel")),
        cost_estimate=cost,
    )(sampled_features, w1, b1, w2, b2)

    rgb = out[..., 1:]
    sigma = out[..., 0:1]
    return {"rgb": rgb, "sigma": sigma}


def make_params(key, n_features, hidden_dim, decoder_output_dim, lr_mul):
    """FullyConnectedLayer: weight = randn(out,in)/lr_mul, bias = 0.
    Forward uses weight * (lr_mul/sqrt(in)) and bias * lr_mul.
    Gains are pre-folded and weights stored as (in, out)."""
    k1, k2 = jax.random.split(key)
    d_out = 1 + decoder_output_dim
    w1_raw = jax.random.normal(k1, (hidden_dim, n_features), jnp.float32) / lr_mul
    w2_raw = jax.random.normal(k2, (d_out, hidden_dim), jnp.float32) / lr_mul
    b1_raw = jnp.zeros((hidden_dim,), jnp.float32)
    b2_raw = jnp.zeros((d_out,), jnp.float32)
    w1 = (w1_raw * (lr_mul / jnp.sqrt(n_features))).T          # (C, H)
    w2 = (w2_raw * (lr_mul / jnp.sqrt(hidden_dim))).T          # (H, D)
    b1 = (b1_raw * lr_mul).reshape(1, hidden_dim)
    b2 = (b2_raw * lr_mul).reshape(1, d_out)
    return {"w1": w1, "b1": b1, "w2": w2, "b2": b2}


def osg_decoder_ref(sampled_features, params):
    x = sampled_features.astype(jnp.float32).mean(axis=1)       # (N, M, C)
    N, M, C = x.shape
    x = x.reshape(N * M, C)
    h = jax.nn.softplus(x @ params["w1"] + params["b1"])
    y = h @ params["w2"] + params["b2"]
    y = y.reshape(N, M, -1)
    rgb = jax.nn.sigmoid(y[..., 1:]) * (1 + 2 * 0.001) - 0.001
    sigma = y[..., 0:1]
    return {"rgb": rgb, "sigma": sigma}


if __name__ == "__main__":
    key = jax.random.PRNGKey(0)
    k_feat, k_ray, k_par, k_feat2 = jax.random.split(key, 4)

    # small shapes consistent with the module
    N, P, M, C = 2, 3, 64, 32          # batch, triplanes, rays*samples, n_features
    hidden_dim = 64
    decoder_output_dim = 3
    lr_mul = 1.0                       # options['decoder_lr_mul']

    # Features fed in bf16 (halves the dominant HBM read); cast happens at
    # construction time, outside the decoder.
    sampled_features = jax.random.normal(
        k_feat, (N, P, M, C), jnp.float32).astype(jnp.bfloat16)
    ray_directions = jax.random.normal(k_ray, (N, M, 3), jnp.float32)
    params = make_params(k_par, C, hidden_dim, decoder_output_dim, lr_mul)

    out = osg_decoder_pallas(sampled_features, ray_directions, params)
    jax.block_until_ready(out)

    ref = osg_decoder_ref(sampled_features, params)
    assert out["rgb"].shape == (N, M, decoder_output_dim)
    assert out["sigma"].shape == (N, M, 1)
    # bf16 inputs + MXU matmul precision => looser tolerance than pure-f32.
    assert jnp.allclose(out["rgb"], ref["rgb"], atol=2e-2, rtol=2e-2)
    assert jnp.allclose(out["sigma"], ref["sigma"], atol=2e-2, rtol=2e-2)

    # Ragged-M case: M not a multiple of the row tile -> exercises Pallas
    # edge-block masking (no host-side pad).
    N2, M2 = 1, 333
    feats2 = jax.random.normal(
        k_feat2, (N2, P, M2, C), jnp.float32).astype(jnp.bfloat16)
    out2 = osg_decoder_pallas(feats2, None, params, tm=128)
    jax.block_until_ready(out2)
    ref2 = osg_decoder_ref(feats2, params)
    assert out2["rgb"].shape == (N2, M2, decoder_output_dim)
    assert out2["sigma"].shape == (N2, M2, 1)
    assert jnp.allclose(out2["rgb"], ref2["rgb"], atol=2e-2, rtol=2e-2)
    assert jnp.allclose(out2["sigma"], ref2["sigma"], atol=2e-2, rtol=2e-2)

    print("KERNEL_OK")
</pallas_src>

<mosaic_0001>
module attributes {stable_mosaic.version = 11 : i64} {
  func.func @_osg_decoder_kernel(%arg0: i32, %arg1: i32, %arg2: memref<1x3x64x32xbf16, #tpu.memory_space<vmem>>, %arg3: memref<32x64xf32, #tpu.memory_space<vmem>>, %arg4: memref<1x64xf32, #tpu.memory_space<vmem>>, %arg5: memref<64x4xf32, #tpu.memory_space<vmem>>, %arg6: memref<1x4xf32, #tpu.memory_space<vmem>>, %arg7: memref<1x64x4xf32, #tpu.memory_space<vmem>>) attributes {dimension_semantics = [#tpu.dimension_semantics<parallel>, #tpu.dimension_semantics<parallel>], iteration_bounds = array<i64: 2, 1>, scalar_prefetch = 0 : i64, scratch_operands = 0 : i64, tpu.core_type = #tpu.core_type<tc>, window_params = [{transform_indices = @transform_0, window_bounds = array<i64: 1, 3, 64, 32>}, {pipeline_mode = #tpu.pipeline_mode<synchronous>, transform_indices = @transform_1, window_bounds = array<i64: 32, 64>}, {pipeline_mode = #tpu.pipeline_mode<synchronous>, transform_indices = @transform_2, window_bounds = array<i64: 1, 64>}, {pipeline_mode = #tpu.pipeline_mode<synchronous>, transform_indices = @transform_3, window_bounds = array<i64: 64, 4>}, {pipeline_mode = #tpu.pipeline_mode<synchronous>, transform_indices = @transform_4, window_bounds = array<i64: 1, 4>}, {transform_indices = @transform_5, window_bounds = array<i64: 1, 64, 4>}]} {
    %c0 = arith.constant 0 : index
    %c0_0 = arith.constant 0 : index
    %c0_1 = arith.constant 0 : index
    %c0_2 = arith.constant 0 : index
    %0 = vector.load %arg2[%c0, %c0_0, %c0_1, %c0_2] : memref<1x3x64x32xbf16, #tpu.memory_space<vmem>>, vector<1x3x64x32xbf16>
    %1 = vector.shape_cast %0 : vector<1x3x64x32xbf16> to vector<3x64x32xbf16>
    %2 = arith.extf %1 : vector<3x64x32xbf16> to vector<3x64x32xf32>
    %cst = arith.constant dense<0.000000e+00> : vector<64x32xf32>
    %3 = vector.multi_reduction <add>, %2, %cst [0] : vector<3x64x32xf32> to vector<64x32xf32>
    %cst_3 = arith.constant 3.000000e+00 : f32
    %4 = vector.broadcast %cst_3 : f32 to vector<64x32xf32>
    %5 = arith.divf %3, %4 : vector<64x32xf32>
    %c0_4 = arith.constant 0 : index
    %c0_5 = arith.constant 0 : index
    %6 = vector.load %arg3[%c0_4, %c0_5] : memref<32x64xf32, #tpu.memory_space<vmem>>, vector<32x64xf32>
    %cst_6 = arith.constant dense<0.000000e+00> : vector<64x64xf32>
    %7 = tpu.matmul %5, %6, %cst_6 {dimension_numbers = #tpu.dot_dimension_numbers<[1], [0], [0], [1], [0, 0, 1, 1], [], []>} : vector<64x32xf32>, vector<32x64xf32>, vector<64x64xf32> -> vector<64x64xf32>
    %c0_7 = arith.constant 0 : index
    %c0_8 = arith.constant 0 : index
    %8 = vector.load %arg4[%c0_7, %c0_8] : memref<1x64xf32, #tpu.memory_space<vmem>>, vector<1x64xf32>
    %9 = vector.broadcast %8 : vector<1x64xf32> to vector<64x64xf32>
    %10 = arith.addf %7, %9 : vector<64x64xf32>
    %cst_9 = arith.constant 0.000000e+00 : f32
    %11 = vector.broadcast %cst_9 : f32 to vector<64x64xf32>
    %12 = arith.maximumf %10, %11 : vector<64x64xf32>
    %13 = vector.broadcast %cst_9 : f32 to vector<64x64xf32>
    %14 = arith.subf %10, %13 : vector<64x64xf32>
    %15 = arith.cmpf one, %14, %14 : vector<64x64xf32>
    %16 = vector.broadcast %cst_9 : f32 to vector<64x64xf32>
    %17 = arith.addf %10, %16 : vector<64x64xf32>
    %18 = math.absf %14 : vector<64x64xf32>
    %cst_10 = arith.constant 0.000000e+00 : f32
    %19 = vector.broadcast %cst_10 : f32 to vector<64x64xf32>
    %20 = arith.subf %19, %18 : vector<64x64xf32>
    %21 = math.exp %20 : vector<64x64xf32>
    %22 = math.log1p %21 : vector<64x64xf32>
    %23 = arith.addf %12, %22 : vector<64x64xf32>
    %24 = arith.select %15, %17, %23 : vector<64x64xi1>, vector<64x64xf32>
    %c0_11 = arith.constant 0 : index
    %c0_12 = arith.constant 0 : index
    %25 = vector.load %arg5[%c0_11, %c0_12] : memref<64x4xf32, #tpu.memory_space<vmem>>, vector<64x4xf32>
    %cst_13 = arith.constant dense<0.000000e+00> : vector<64x4xf32>
    %26 = tpu.matmul %24, %25, %cst_13 {dimension_numbers = #tpu.dot_dimension_numbers<[1], [0], [0], [1], [0, 0, 1, 1], [], []>} : vector<64x64xf32>, vector<64x4xf32>, vector<64x4xf32> -> vector<64x4xf32>
    %c0_14 = arith.constant 0 : index
    %c0_15 = arith.constant 0 : index
    %27 = vector.load %arg6[%c0_14, %c0_15] : memref<1x4xf32, #tpu.memory_space<vmem>>, vector<1x4xf32>
    %28 = vector.broadcast %27 : vector<1x4xf32> to vector<64x4xf32>
    %29 = arith.addf %26, %28 : vector<64x4xf32>
    %cst_16 = arith.constant 0.000000e+00 : f32
    %30 = vector.broadcast %cst_16 : f32 to vector<64x4xf32>
    %31 = arith.subf %30, %29 : vector<64x4xf32>
    %32 = math.exp %31 : vector<64x4xf32>
    %cst_17 = arith.constant 1.000000e+00 : f32
    %33 = vector.broadcast %cst_17 : f32 to vector<64x4xf32>
    %34 = arith.addf %33, %32 : vector<64x4xf32>
    %cst_18 = arith.constant 1.000000e+00 : f32
    %35 = vector.broadcast %cst_18 : f32 to vector<64x4xf32>
    %36 = arith.divf %35, %34 : vector<64x4xf32>
    %cst_19 = arith.constant 1.002000e+00 : f32
    %37 = vector.broadcast %cst_19 : f32 to vector<64x4xf32>
    %38 = arith.mulf %36, %37 : vector<64x4xf32>
    %cst_20 = arith.constant 1.000000e-03 : f32
    %39 = vector.broadcast %cst_20 : f32 to vector<64x4xf32>
    %40 = arith.subf %38, %39 : vector<64x4xf32>
    %41 = tpu.iota {dimensions = array<i32: 1>} : vector<64x4xi32>
    %c0_i32 = arith.constant 0 : i32
    %42 = vector.broadcast %c0_i32 : i32 to vector<64x4xi32>
    %43 = arith.cmpi eq, %41, %42 : vector<64x4xi32>
    %44 = arith.select %43, %29, %40 : vector<64x4xi1>, vector<64x4xf32>
    %c0_21 = arith.constant 0 : index
    %c0_22 = arith.constant 0 : index
    %c0_23 = arith.constant 0 : index
    %45 = vector.load %arg7[%c0_21, %c0_22, %c0_23] : memref<1x64x4xf32, #tpu.memory_space<vmem>>, vector<1x64x4xf32>
    %46 = vector.shape_cast %45 : vector<1x64x4xf32> to vector<64x4xf32>
    %47 = vector.shape_cast %44 : vector<64x4xf32> to vector<1x64x4xf32>
    tpu.vector_store %arg7[%c0_21, %c0_22, %c0_23], %47 {strides = array<i32>} : memref<1x64x4xf32, #tpu.memory_space<vmem>>, vector<1x64x4xf32>,
    return
  }
  func.func @transform_0(%arg0: i32, %arg1: i32) -> (i32, i32, i32, i32) {
    %c0_i32 = arith.constant 0 : i32
    %c0_i32_0 = arith.constant 0 : i32
    %c0_i32_1 = arith.constant 0 : i32
    return %arg0, %c0_i32, %arg1, %c0_i32_0 : i32, i32, i32, i32
  }
  func.func @transform_1(%arg0: i32, %arg1: i32) -> (i32, i32) {
    %c0_i32 = arith.constant 0 : i32
    %c0_i32_0 = arith.constant 0 : i32
    %c0_i32_1 = arith.constant 0 : i32
    return %c0_i32, %c0_i32_0 : i32, i32
  }
  func.func @transform_2(%arg0: i32, %arg1: i32) -> (i32, i32) {
    %c0_i32 = arith.constant 0 : i32
    %c0_i32_0 = arith.constant 0 : i32
    %c0_i32_1 = arith.constant 0 : i32
    return %c0_i32, %c0_i32_0 : i32, i32
  }
  func.func @transform_3(%arg0: i32, %arg1: i32) -> (i32, i32) {
    %c0_i32 = arith.constant 0 : i32
    %c0_i32_0 = arith.constant 0 : i32
    %c0_i32_1 = arith.constant 0 : i32
    return %c0_i32, %c0_i32_0 : i32, i32
  }
  func.func @transform_4(%arg0: i32, %arg1: i32) -> (i32, i32) {
    %c0_i32 = arith.constant 0 : i32
    %c0_i32_0 = arith.constant 0 : i32
    %c0_i32_1 = arith.constant 0 : i32
    return %c0_i32, %c0_i32_0 : i32, i32
  }
  func.func @transform_5(%arg0: i32, %arg1: i32) -> (i32, i32, i32) {
    %c0_i32 = arith.constant 0 : i32
    %c0_i32_0 = arith.constant 0 : i32
    return %arg0, %arg1, %c0_i32 : i32, i32, i32
  }
}

</mosaic_0001>

<llo_original>
// kernel: tpu_custom_call.1
$region0: #{tpu_custom_call.1}
  #allocation0 [shape = 'u32[]', space=smem, size = 0x4, offset = 0x4, fixed_abs, tag = 'smem constant byte address 0x4 - core index']
  #allocation1 [shape = 'u32[144,128]{1,0:T(1,128)}', space=vmem, size = 0x12000, scoped, tag = 'internal scratch']
  %s0 = inlined_call_operand.vmem [shape: bf16[2,3,64,32], index: 0, kind: input, shape index: {}]
  %s1 = inlined_call_operand.vmem [shape: f32[32,64], index: 1, kind: input, shape index: {}]
  %s2 = inlined_call_operand.vmem [shape: f32[1,64], index: 2, kind: input, shape index: {}]
  %s3 = inlined_call_operand.vmem [shape: f32[64,4], index: 3, kind: input, shape index: {}]
  %s4 = inlined_call_operand.vmem [shape: f32[1,4], index: 4, kind: input, shape index: {}]
  %s5 = inlined_call_operand.vmem [shape: f32[2,64,4], index: 5, kind: output, shape index: {}]
  %s6 = sld [smem:[#allocation0]]
  $region53: #{tpu_custom_call.1} parent=0
    _
  %s8 = ssub.s32 1, %s6
  %s9 = scalar_select 0, %s8, %s6
  loop: start=0, step=1, limit=4
  $region2: #{tpu_custom_call.1} parent=0 // loop_pre_header
    _
  $region3: #{tpu_custom_call.1} parent=0 // loop_header
    %s11 = sphi 0, %s15
    %p12 = scmp.ge.s32.totalorder %s11, 4
    %s18 = sphi 0, %s30
    %s19 = sphi 0, %s26
    %s20 = sphi 0, %s18
    %s21 = sphi 0, %s19
    %s22 = sphi 0, %s20
    %s23 = sphi 0, %s21
    %s35 = sphi 0, %s37
    %s38 = sphi 0, %s35
    %s39 = sphi 0, %s38
    %s55 = sphi 0, %s39
    %s59 = sphi 0, %s59
    %s61 = sphi 0, %s59
    %s62 = sphi 0, %s61
    %s76 = sphi 0, %s62
    %s80 = sphi 0, %s80
    %s82 = sphi 0, %s80
    %s83 = sphi 0, %s82
    %s97 = sphi 0, %s83
    %s101 = sphi 0, %s101
    %s103 = sphi 0, %s101
    %s104 = sphi 0, %s103
    %s118 = sphi 0, %s104
    %s122 = sphi 0, %s122
    %s124 = sphi 0, %s122
    %s125 = sphi 0, %s124
    %s139 = sphi 0, %s125
    %s147 = sphi 0, %s149
    %s150 = sphi 0, %s147
    %s151 = sphi 0, %s150
    %s167 = sphi 0, %s151
  $region4: #{tpu_custom_call.1} parent=0 // loop_header_branch
    %14 = sbr.rel (%p12) target = $region8
  $region5: #{tpu_custom_call.1} parent=0 // loop_body
    %s16 = ssub.s32 %s11, 1
    %s17 = ssub.s32 %s11, 2
    %s24 = sadd.s32 1, %s19
    %p25 = scmp.ge.s32.totalorder %s24, 1
    %s26 = scalar_select %p25, 0, %s24
    %s27 = sadd.s32 1, %s18
    %s28 = scalar_select %p25, %s27, %s18
    %p29 = scmp.ge.s32.totalorder %s28, 2
    %s30 = scalar_select %p29, 0, %s28
    %s31 = ssub.s32 %s18, %s30
    %s32 = ssub.s32 %s19, %s26
    %s33 = sor.u32 %s31, %s32
    %p34 = scmp.eq.s32.totalorder %s33, 0
    %s36 = sadd.s32 %s35, 1
    %s37 = scalar_select %p34, %s35, %s36
    %p40 = pneg %p34
    %p41 = scmp.eq.s32.totalorder %s11, 1
    %p42 = por %p40, %p41
    %p43 = scmp.ne.s32.totalorder %s35, %s38
    %p44 = scmp.eq.s32.totalorder %s11, 0
    %p45 = por %p43, %p44
    %p46 = scmp.ne.s32.totalorder %s35, %s38
    %p47 = scmp.eq.s32.totalorder %s16, 1
    %p48 = por %p46, %p47
    %p49 = scmp.ne.s32.totalorder %s38, %s39
    %p50 = scmp.eq.s32.totalorder %s16, 0
    %p51 = por %p49, %p50
    %p52 = scmp.ne.s32.totalorder %s38, %s39
    %p53 = scmp.eq.s32.totalorder %s17, 1
    %p54 = por %p52, %p53
    %p56 = scmp.ne.s32.totalorder %s39, %s55
    %p57 = scmp.eq.s32.totalorder %s17, 0
    %p58 = por %p56, %p57
    %s60 = sadd.s32 %s59, 1
    %p63 = scmp.eq.s32.totalorder %s11, 1
    %p64 = scmp.ne.s32.totalorder %s59, %s61
    %p65 = scmp.eq.s32.totalorder %s11, 0
    %p66 = por %p64, %p65
    %p67 = scmp.ne.s32.totalorder %s59, %s61
    %p68 = scmp.eq.s32.totalorder %s16, 1
    %p69 = por %p67, %p68
    %p70 = scmp.ne.s32.totalorder %s61, %s62
    %p71 = scmp.eq.s32.totalorder %s16, 0
    %p72 = por %p70, %p71
    %p73 = scmp.ne.s32.totalorder %s61, %s62
    %p74 = scmp.eq.s32.totalorder %s17, 1
    %p75 = por %p73, %p74
    %p77 = scmp.ne.s32.totalorder %s62, %s76
    %p78 = scmp.eq.s32.totalorder %s17, 0
    %p79 = por %p77, %p78
    %s81 = sadd.s32 %s80, 1
    %p84 = scmp.eq.s32.totalorder %s11, 1
    %p85 = scmp.ne.s32.totalorder %s80, %s82
    %p86 = scmp.eq.s32.totalorder %s11, 0
    %p87 = por %p85, %p86
    %p88 = scmp.ne.s32.totalorder %s80, %s82
    %p89 = scmp.eq.s32.totalorder %s16, 1
    %p90 = por %p88, %p89
    %p91 = scmp.ne.s32.totalorder %s82, %s83
    %p92 = scmp.eq.s32.totalorder %s16, 0
    %p93 = por %p91, %p92
    %p94 = scmp.ne.s32.totalorder %s82, %s83
    %p95 = scmp.eq.s32.totalorder %s17, 1
    %p96 = por %p94, %p95
    %p98 = scmp.ne.s32.totalorder %s83, %s97
    %p99 = scmp.eq.s32.totalorder %s17, 0
    %p100 = por %p98, %p99
    %s102 = sadd.s32 %s101, 1
    %p105 = scmp.eq.s32.totalorder %s11, 1
    %p106 = scmp.ne.s32.totalorder %s101, %s103
    %p107 = scmp.eq.s32.totalorder %s11, 0
    %p108 = por %p106, %p107
    %p109 = scmp.ne.s32.totalorder %s101, %s103
    %p110 = scmp.eq.s32.totalorder %s16, 1
    %p111 = por %p109, %p110
    %p112 = scmp.ne.s32.totalorder %s103, %s104
    %p113 = scmp.eq.s32.totalorder %s16, 0
    %p114 = por %p112, %p113
    %p115 = scmp.ne.s32.totalorder %s103, %s104
    %p116 = scmp.eq.s32.totalorder %s17, 1
    %p117 = por %p115, %p116
    %p119 = scmp.ne.s32.totalorder %s104, %s118
    %p120 = scmp.eq.s32.totalorder %s17, 0
    %p121 = por %p119, %p120
    %s123 = sadd.s32 %s122, 1
    %p126 = scmp.eq.s32.totalorder %s11, 1
    %p127 = scmp.ne.s32.totalorder %s122, %s124
    %p128 = scmp.eq.s32.totalorder %s11, 0
    %p129 = por %p127, %p128
    %p130 = scmp.ne.s32.totalorder %s122, %s124
    %p131 = scmp.eq.s32.totalorder %s16, 1
    %p132 = por %p130, %p131
    %p133 = scmp.ne.s32.totalorder %s124, %s125
    %p134 = scmp.eq.s32.totalorder %s16, 0
    %p135 = por %p133, %p134
    %p136 = scmp.ne.s32.totalorder %s124, %s125
    %p137 = scmp.eq.s32.totalorder %s17, 1
    %p138 = por %p136, %p137
    %p140 = scmp.ne.s32.totalorder %s125, %s139
    %p141 = scmp.eq.s32.totalorder %s17, 0
    %p142 = por %p140, %p141
    %s143 = ssub.s32 %s18, %s30
    %s144 = ssub.s32 %s19, %s26
    %s145 = sor.u32 %s143, %s144
    %p146 = scmp.eq.s32.totalorder %s145, 0
    %s148 = sadd.s32 %s147, 1
    %s149 = scalar_select %p146, %s147, %s148
    %p152 = pneg %p146
    %p153 = scmp.eq.s32.totalorder %s11, 1
    %p154 = por %p152, %p153
    %p155 = scmp.ne.s32.totalorder %s147, %s150
    %p156 = scmp.eq.s32.totalorder %s11, 0
    %p157 = por %p155, %p156
    %p158 = scmp.ne.s32.totalorder %s147, %s150
    %p159 = scmp.eq.s32.totalorder %s16, 1
    %p160 = por %p158, %p159
    %p161 = scmp.ne.s32.totalorder %s150, %s151
    %p162 = scmp.eq.s32.totalorder %s16, 0
    %p163 = por %p161, %p162
    %p164 = scmp.ne.s32.totalorder %s150, %s151
    %p165 = scmp.eq.s32.totalorder %s17, 1
    %p166 = por %p164, %p165
    %p168 = scmp.ne.s32.totalorder %s151, %s167
    %p169 = scmp.eq.s32.totalorder %s17, 0
    %p170 = por %p168, %p169
    %p171 = scmp.le.s32.totalorder 1, %s11
    %p172 = scmp.lt.s32.totalorder %s11, 3
    %p173 = pnand %p171, %p172
    %p174 = pneg %p173
    // Predicated region
    $region9: #{tpu_custom_call.1} parent=5 // pred_check
      _
    $region10: #{tpu_custom_call.1} parent=5 // pred_check_branch
      %176 = sbr.rel (%p173) target = $region12
    $region11: #{tpu_custom_call.1} parent=5 // pred_region
      %s177 = ssub.s32 %s11, 1
      // Predicated region
      $region13: #{tpu_custom_call.1} parent=11 // pred_check
        %p178 = pneg %p72
      $region14: #{tpu_custom_call.1} parent=11 // pred_check_branch
        %180 = sbr.rel (%p178) target = $region16
      $region15: #{tpu_custom_call.1} parent=11 // pred_region
        _
      $region16: #{tpu_custom_call.1} parent=11 // pred_fallthru
        _
      // Predicated region
      $region17: #{tpu_custom_call.1} parent=11 // pred_check
        %p181 = pneg %p93
      $region18: #{tpu_custom_call.1} parent=11 // pred_check_branch
        %183 = sbr.rel (%p181) target = $region20
      $region19: #{tpu_custom_call.1} parent=11 // pred_region
        _
      $region20: #{tpu_custom_call.1} parent=11 // pred_fallthru
        _
      // Predicated region
      $region21: #{tpu_custom_call.1} parent=11 // pred_check
        %p184 = pneg %p114
      $region22: #{tpu_custom_call.1} parent=11 // pred_check_branch
        %186 = sbr.rel (%p184) target = $region24
      $region23: #{tpu_custom_call.1} parent=11 // pred_region
        _
      $region24: #{tpu_custom_call.1} parent=11 // pred_fallthru
        _
      // Predicated region
      $region25: #{tpu_custom_call.1} parent=11 // pred_check
        %p187 = pneg %p135
      $region26: #{tpu_custom_call.1} parent=11 // pred_check_branch
        %189 = sbr.rel (%p187) target = $region28
      $region27: #{tpu_custom_call.1} parent=11 // pred_region
        _
      $region28: #{tpu_custom_call.1} parent=11 // pred_fallthru
        _
    $region12: #{tpu_custom_call.1} parent=5 // pred_fallthru
      _
    %p190 = scmp.lt.s32.totalorder %s11, 2
    // Predicated region
    $region29: #{tpu_custom_call.1} parent=5 // pred_check
      %p191 = pneg %p190
    $region30: #{tpu_custom_call.1} parent=5 // pred_check_branch
      %193 = sbr.rel (%p191) target = $region32
    $region31: #{tpu_custom_call.1} parent=5 // pred_region
      // Predicated region
      $region33: #{tpu_custom_call.1} parent=31 // pred_check
        %p194 = pneg %p45
      $region34: #{tpu_custom_call.1} parent=31 // pred_check_branch
        %196 = sbr.rel (%p194) target = $region36
      $region35: #{tpu_custom_call.1} parent=31 // pred_region
        %s197 = smul.u32 8, %s19
        %p198 = scmp.lt.s32.totalorder %s18, 1
        %s199 = scalar_select %p198, %s18, 1
        %p200 = scmp.lt.s32.totalorder %s197, 7
        %s201 = scalar_select %p200, %s197, 7
        %s202 = smul.addr %s199, 24
        %s203 = sadd.s32 %s201, %s202
        %s204 = smul.addr %s203, 4
        %s205 = scalar_lea.vmem %s0, %s204
        %s206 = smul.u32 8, %s19
      $region36: #{tpu_custom_call.1} parent=31 // pred_fallthru
        _
    $region32: #{tpu_custom_call.1} parent=5 // pred_fallthru
      _
    %p207 = scmp.le.s32.totalorder 1, %s11
    %p208 = scmp.lt.s32.totalorder %s11, 3
    %p209 = pnand %p207, %p208
    %p210 = pneg %p209
    // Predicated region
    $region37: #{tpu_custom_call.1} parent=5 // pred_check
      _
    $region38: #{tpu_custom_call.1} parent=5 // pred_check_branch
      %212 = sbr.rel (%p209) target = $region40
    $region39: #{tpu_custom_call.1} parent=5 // pred_region
      %s213 = ssub.s32 %s11, 1
      %s214 = smul.u32 8, %s21
      %p215 = scmp.lt.s32.totalorder %s20, 1
      %s216 = scalar_select %p215, %s20, 1
      %p217 = scmp.lt.s32.totalorder %s214, 7
      %s218 = scalar_select %p217, %s214, 7
      %s219 = smul.addr %s216, 24
      %s220 = sadd.s32 %s218, %s219
      %s221 = smul.addr %s220, 4
      %s222 = scalar_lea.vmem %s0, %s221
      %p223 = pneg %p51
      %p224 = pneg %p48
      %p225 = pneg %p72
      %p226 = pneg %p69
      %p227 = pneg %p93
      %p228 = pneg %p90
      %p229 = pneg %p114
      %p230 = pneg %p111
      %p231 = pneg %p135
      %p232 = pneg %p132
      %p233 = pneg %p163
      %p234 = pneg %p160
      %s235 = smul.u32 8, %s21
      %p236 = scmp.lt.s32.totalorder %s20, 1
      %s237 = scalar_select %p236, %s20, 1
      %p238 = scmp.lt.s32.totalorder %s235, 7
      %s239 = scalar_select %p238, %s235, 7
      %s240 = smul.addr %s237, 8
      %s241 = sadd.s32 %s239, %s240
      %s242 = smul.addr %s241, 8
      %s243 = scalar_lea.vmem %s5, %s242
      %s244 = smul.u32 8, %s21
      %p245 = scmp.lt.s32.totalorder %s20, 1
      %s246 = scalar_select %p245, %s20, 1
      %p247 = scmp.lt.s32.totalorder %s244, 7
      %s248 = scalar_select %p247, %s244, 7
      %s249 = smul.addr %s246, 24
      %s250 = sadd.s32 %s248, %s249
      %s251 = smul.addr %s250, 4
      %s252 = scalar_lea.vmem %s0, %s251
      %s253 = smul.u32 8, %s21
      %s254 = smul.u32 8, %s21
      %p255 = scmp.lt.s32.totalorder %s20, 1
      %s256 = scalar_select %p255, %s20, 1
      %p257 = scmp.lt.s32.totalorder %s254, 7
      %s258 = scalar_select %p257, %s254, 7
      %s259 = smul.addr %s256, 8
      %s260 = sadd.s32 %s258, %s259
      %s261 = smul.addr %s260, 8
      %s262 = scalar_lea.vmem %s5, %s261
      %s263 = smul.u32 8, %s21
      %v264 = vld [vmem:[%s252] sm:$0xf]
      %v265 = vld [vmem:[%s252 + $0x4] sm:$0xf]
      %v266 = vld [vmem:[%s252 + $0x8] sm:$0xf]
      %v267 = vld [vmem:[%s252 + $0xc] sm:$0xf]
      %v268 = vld [vmem:[%s252 + $0x10] sm:$0xf]
      %v269 = vld [vmem:[%s252 + $0x14] sm:$0xf]
      %v270 = vld [vmem:[%s252 + $0x18] sm:$0xf]
      %v271 = vld [vmem:[%s252 + $0x1c] sm:$0xf]
      %v272 = vld [vmem:[%s252 + $0x20] sm:$0xf]
      %v273 = vld [vmem:[%s252 + $0x24] sm:$0xf]
      %v274 = vld [vmem:[%s252 + $0x28] sm:$0xf]
      %v275 = vld [vmem:[%s252 + $0x2c] sm:$0xf]
      %v276 = vld [vmem:[%s252 + $0x30] sm:$0xf]
      %v277 = vld [vmem:[%s252 + $0x34] sm:$0xf]
      %v278 = vld [vmem:[%s252 + $0x38] sm:$0xf]
      %v279 = vld [vmem:[%s252 + $0x3c] sm:$0xf]
      %v280 = vld [vmem:[%s252 + $0x40] sm:$0xf]
      %v281 = vld [vmem:[%s252 + $0x44] sm:$0xf]
      %v282 = vld [vmem:[%s252 + $0x48] sm:$0xf]
      %v283 = vld [vmem:[%s252 + $0x4c] sm:$0xf]
      %v284 = vld [vmem:[%s252 + $0x50] sm:$0xf]
      %v285 = vld [vmem:[%s252 + $0x54] sm:$0xf]
      %v286 = vld [vmem:[%s252 + $0x58] sm:$0xf]
      %v287 = vld [vmem:[%s252 + $0x5c] sm:$0xf]
      %v288 = vunpack.c.l.bf16 %v264
      %v289 = vunpack.c.l.bf16 %v265
      %v290 = vunpack.c.l.bf16 %v266
      %v291 = vunpack.c.l.bf16 %v267
      %v292 = vunpack.c.l.bf16 %v268
      %v293 = vunpack.c.l.bf16 %v269
      %v294 = vunpack.c.l.bf16 %v270
      %v295 = vunpack.c.l.bf16 %v271
      %v296 = vunpack.c.l.bf16 %v272
      %v297 = vunpack.c.l.bf16 %v273
      %v298 = vunpack.c.l.bf16 %v274
      %v299 = vunpack.c.l.bf16 %v275
      %v300 = vunpack.c.l.bf16 %v276
      %v301 = vunpack.c.l.bf16 %v277
      %v302 = vunpack.c.l.bf16 %v278
      %v303 = vunpack.c.l.bf16 %v279
      %v304 = vunpack.c.l.bf16 %v280
      %v305 = vunpack.c.l.bf16 %v281
      %v306 = vunpack.c.l.bf16 %v282
      %v307 = vunpack.c.l.bf16 %v283
      %v308 = vunpack.c.l.bf16 %v284
      %v309 = vunpack.c.l.bf16 %v285
      %v310 = vunpack.c.l.bf16 %v286
      %v311 = vunpack.c.l.bf16 %v287
      %vm312 = vcmask 261120
      %v313 = vsel %vm312, %v288, 0.0
      %v314 = vsel %vm312, %v296, 0.0
      %v315 = vadd.f32 %v313, %v314
      %v316 = vsel %vm312, %v304, 0.0
      %v317 = vadd.f32 %v315, %v316
      %v318 = vsel %vm312, %v289, 0.0
      %v319 = vsel %vm312, %v297, 0.0
      %v320 = vadd.f32 %v318, %v319
      %v321 = vsel %vm312, %v305, 0.0
      %v322 = vadd.f32 %v320, %v321
      %v323 = vsel %vm312, %v290, 0.0
      %v324 = vsel %vm312, %v298, 0.0
      %v325 = vadd.f32 %v323, %v324
      %v326 = vsel %vm312, %v306, 0.0
      %v327 = vadd.f32 %v325, %v326
      %v328 = vsel %vm312, %v291, 0.0
      %v329 = vsel %vm312, %v299, 0.0
      %v330 = vadd.f32 %v328, %v329
      %v331 = vsel %vm312, %v307, 0.0
      %v332 = vadd.f32 %v330, %v331
      %v333 = vsel %vm312, %v292, 0.0
      %v334 = vsel %vm312, %v300, 0.0
      %v335 = vadd.f32 %v333, %v334
      %v336 = vsel %vm312, %v308, 0.0
      %v337 = vadd.f32 %v335, %v336
      %v338 = vsel %vm312, %v293, 0.0
      %v339 = vsel %vm312, %v301, 0.0
      %v340 = vadd.f32 %v338, %v339
      %v341 = vsel %vm312, %v309, 0.0
      %v342 = vadd.f32 %v340, %v341
      %v343 = vsel %vm312, %v294, 0.0
      %v344 = vsel %vm312, %v302, 0.0
      %v345 = vadd.f32 %v343, %v344
      %v346 = vsel %vm312, %v310, 0.0
      %v347 = vadd.f32 %v345, %v346
      %v348 = vsel %vm312, %v295, 0.0
      %v349 = vsel %vm312, %v303, 0.0
      %v350 = vadd.f32 %v348, %v349
      %v351 = vsel %vm312, %v311, 0.0
      %v352 = vadd.f32 %v350, %v351
      %v353 = vrcp.pop 3.0
      %v354 = vmul.f32 %v317, %v353
      %v355 = vmul.f32 %v322, %v353
      %v356 = vmul.f32 %v327, %v353
      %v357 = vmul.f32 %v332, %v353
      %v358 = vmul.f32 %v337, %v353
      %v359 = vmul.f32 %v342, %v353
      %v360 = vmul.f32 %v347, %v353
      %v361 = vmul.f32 %v352, %v353
      %v362 = vld [vmem:[%s1] sm:$0xff]
      %v363 = vld [vmem:[%s1 + $0x8] sm:$0xff]
      %v364 = vld [vmem:[%s1 + $0x10] sm:$0xff]
      %v365 = vld [vmem:[%s1 + $0x18] sm:$0xff]
      %v366 = vld [vmem:[%s2] sm:$0x1]
      %v368 = vlaneseq
      %v369 = vshrl.u32 %v368, 7
      %v370 = vsub.s32 0, %v369
      %v371 = vrot.slane %v366, %v370
      %v374 = vsel %vm312, %v354, 0
      %v377 = vsel %vm312, %v355, 0
      %v380 = vsel %vm312, %v356, 0
      %v383 = vsel %vm312, %v357, 0
      %v386 = vsel %vm312, %v358, 0
      %v389 = vsel %vm312, %v359, 0
      %v392 = vsel %vm312, %v360, 0
      %v395 = vsel %vm312, %v361, 0
      %397 = vmatprep.subr.mxu0 0.0
      %398 = vmatpush1.msra.mxu0 %v362
      %399 = vmatprep.subr.mxu0 0.0
      %400 = vmatpush1.msra.mxu0 %v363
      %401 = vmatprep.subr.mxu0 0.0
      %402 = vmatpush1.msra.mxu0 %v364
      %403 = vmatprep.subr.mxu0 0.0
      %404 = vmatpush1.msra.mxu0 %v365
      %405 = vmatprep.subr.mxu0 0.0
      %406 = vmatpush1.msra.mxu0 0.0
      %407 = vmatprep.subr.mxu0 0.0
      %408 = vmatpush1.msra.mxu0 0.0
      %409 = vmatprep.subr.mxu0 0.0
      %410 = vmatpush1.msra.mxu0 0.0
      %411 = vmatprep.subr.mxu0 0.0
      %412 = vmatpush1.msra.mxu0 0.0
      %413 = vmatprep.subr.mxu0 0.0
      %414 = vmatpush1.msra.mxu0 0.0
      %415 = vmatprep.subr.mxu0 0.0
      %416 = vmatpush1.msra.mxu0 0.0
      %417 = vmatprep.subr.mxu0 0.0
      %418 = vmatpush1.msra.mxu0 0.0
      %419 = vmatprep.subr.mxu0 0.0
      %420 = vmatpush1.msra.mxu0 0.0
      %421 = vmatprep.subr.mxu0 0.0
      %422 = vmatpush1.msra.mxu0 0.0
      %423 = vmatprep.subr.mxu0 0.0
      %424 = vmatpush1.msra.mxu0 0.0
      %425 = vmatprep.subr.mxu0 0.0
      %426 = vmatpush1.msra.mxu0 0.0
      %427 = vmatprep.subr.mxu0 0.0
      %428 = vmatpush1.msra.mxu0 0.0
      %429 = vmatprep.subr.mxu0 0.0
      %430 = vmatpush1.msra.mxu0 0.0
      %431 = vmatprep.subr.mxu0 0.0
      %432 = vmatpush1.msra.mxu0 0.0
      %433 = vmatprep.subr.mxu0 0.0
      %434 = vmatpush1.msra.mxu0 0.0
      %435 = vmatprep.subr.mxu0 0.0
      %436 = vmatpush1.msra.mxu0 0.0
      %437 = vmatprep.subr.mxu0 0.0
      %438 = vmatpush1.msra.mxu0 0.0
      %439 = vmatprep.subr.mxu0 0.0
      %440 = vmatpush1.msra.mxu0 0.0
      %441 = vmatprep.subr.mxu0 0.0
      %442 = vmatpush1.msra.mxu0 0.0
      %443 = vmatprep.subr.mxu0 0.0
      %444 = vmatpush1.msra.mxu0 0.0
      %445 = vmatprep.subr.mxu0 0.0
      %446 = vmatpush1.msra.mxu0 0.0
      %447 = vmatprep.subr.mxu0 0.0
      %448 = vmatpush1.msra.mxu0 0.0
      %449 = vmatprep.subr.mxu0 0.0
      %450 = vmatpush1.msra.mxu0 0.0
      %451 = vmatprep.subr.mxu0 0.0
      %452 = vmatpush1.msra.mxu0 0.0
      %453 = vmatprep.subr.mxu0 0.0
      %454 = vmatpush1.msra.mxu0 0.0
      %455 = vmatprep.subr.mxu0 0.0
      %456 = vmatpush1.msra.mxu0 0.0
      %457 = vmatprep.subr.mxu0 0.0
      %458 = vmatpush1.msra.mxu0 0.0
      %459 = vmatprep.subr.mxu0 0.0
      %460 = vmatpush1.msra.mxu0 0.0
      %461 = vmatprep.mubr.f32.mxu0 0.0
      %462 = vmatmul.mubr.f32.gmra.mrb[0].mxu0 %v374
      %v463 = vpop.f32.mrb[0].mxu0
      %v464 = vadd.f32 %v371, %v463
      %v465 = vpop.f32.mrb[0].mxu0
      %466 = vmatprep.mubr.f32.mxu0 0.0
      %467 = vmatmul.mubr.f32.gmra.mrb[0].mxu0 %v377
      %v468 = vpop.f32.mrb[0].mxu0
      %v469 = vadd.f32 %v371, %v468
      %v470 = vpop.f32.mrb[0].mxu0
      %471 = vmatprep.mubr.f32.mxu0 0.0
      %472 = vmatmul.mubr.f32.gmra.mrb[0].mxu0 %v380
      %v473 = vpop.f32.mrb[0].mxu0
      %v474 = vadd.f32 %v371, %v473
      %v475 = vpop.f32.mrb[0].mxu0
      %476 = vmatprep.mubr.f32.mxu0 0.0
      %477 = vmatmul.mubr.f32.gmra.mrb[0].mxu0 %v383
      %v478 = vpop.f32.mrb[0].mxu0
      %v479 = vadd.f32 %v371, %v478
      %v480 = vpop.f32.mrb[0].mxu0
      %481 = vmatprep.mubr.f32.mxu0 0.0
      %482 = vmatmul.mubr.f32.gmra.mrb[0].mxu0 %v386
      %v483 = vpop.f32.mrb[0].mxu0
      %v484 = vadd.f32 %v371, %v483
      %v485 = vpop.f32.mrb[0].mxu0
      %486 = vmatprep.mubr.f32.mxu0 0.0
      %487 = vmatmul.mubr.f32.gmra.mrb[0].mxu0 %v389
      %v488 = vpop.f32.mrb[0].mxu0
      %v489 = vadd.f32 %v371, %v488
      %v490 = vpop.f32.mrb[0].mxu0
      %491 = vmatprep.mubr.f32.mxu0 0.0
      %492 = vmatmul.mubr.f32.gmra.mrb[0].mxu0 %v392
      %v493 = vpop.f32.mrb[0].mxu0
      %v494 = vadd.f32 %v371, %v493
      %v495 = vpop.f32.mrb[0].mxu0
      %496 = vmatprep.mubr.f32.mxu0 0.0
      %497 = vmatmul.mubr.f32.gmra.mrb[0].mxu0 %v395
      %v498 = vpop.f32.mrb[0].mxu0
      %v499 = vadd.f32 %v371, %v498
      %v500 = vpop.f32.mrb[0].mxu0
      %501 = vdwg.mxu0
      %v502 = vmax.f32 %v464, 0.0
      %v503 = vmax.f32 %v469, 0.0
      %v504 = vmax.f32 %v474, 0.0
      %v505 = vmax.f32 %v479, 0.0
      %v506 = vmax.f32 %v484, 0.0
      %v507 = vmax.f32 %v489, 0.0
      %v508 = vmax.f32 %v494, 0.0
      %v509 = vmax.f32 %v499, 0.0
      %vm510 = vcmp.ne.f32.partialorder %v464, %v464
      %vm511 = vcmp.ne.f32.partialorder %v469, %v469
      %vm512 = vcmp.ne.f32.partialorder %v474, %v474
      %vm513 = vcmp.ne.f32.partialorder %v479, %v479
      %vm514 = vcmp.ne.f32.partialorder %v484, %v484
      %vm515 = vcmp.ne.f32.partialorder %v489, %v489
      %vm516 = vcmp.ne.f32.partialorder %v494, %v494
      %vm517 = vcmp.ne.f32.partialorder %v499, %v499
      %v518 = vadd.f32 %v464, 0.0
      %v519 = vadd.f32 %v469, 0.0
      %v520 = vadd.f32 %v474, 0.0
      %v521 = vadd.f32 %v479, 0.0
      %v522 = vadd.f32 %v484, 0.0
      %v523 = vadd.f32 %v489, 0.0
      %v524 = vadd.f32 %v494, 0.0
      %v525 = vadd.f32 %v499, 0.0
      %v526 = vand.u32 2147483647, %v464
      %v527 = vand.u32 2147483647, %v469
      %v528 = vand.u32 2147483647, %v474
      %v529 = vand.u32 2147483647, %v479
      %v530 = vand.u32 2147483647, %v484
      %v531 = vand.u32 2147483647, %v489
      %v532 = vand.u32 2147483647, %v494
      %v533 = vand.u32 2147483647, %v499
      %v534 = vsub.f32 0.0, %v526
      %v535 = vsub.f32 0.0, %v527
      %v536 = vsub.f32 0.0, %v528
      %v537 = vsub.f32 0.0, %v529
      %v538 = vsub.f32 0.0, %v530
      %v539 = vsub.f32 0.0, %v531
      %v540 = vsub.f32 0.0, %v532
      %v541 = vsub.f32 0.0, %v533
      %v542 = vmul.f32 %v534, 1.442695
      %v543 = vpow.pop %v542
      %v544 = vmul.f32 %v535, 1.442695
      %v545 = vpow.pop %v544
      %v546 = vmul.f32 %v536, 1.442695
      %v547 = vpow.pop %v546
      %v548 = vmul.f32 %v537, 1.442695
      %v549 = vpow.pop %v548
      %v550 = vmul.f32 %v538, 1.442695
      %v551 = vpow.pop %v550
      %v552 = vmul.f32 %v539, 1.442695
      %v553 = vpow.pop %v552
      %v554 = vmul.f32 %v540, 1.442695
      %v555 = vpow.pop %v554
      %v556 = vmul.f32 %v541, 1.442695
      %v557 = vpow.pop %v556
      %v558 = vadd.f32 %v543, 1.0
      %v559 = vlog2.pop %v558
      %v560 = vmul.f32 %v559, 0.6931472
      %v561 = vmul.f32 -0.5, %v543
      %v562 = vadd.f32 %v561, 1.0
      %v563 = vmul.f32 %v562, %v543
      %v564 = vand.u32 2147483647, %v543
      %vm565 = vcmp.lt.f32.partialorder %v564, 0.0004427343
      %v566 = vsel %vm565, %v563, %v560
      %v567 = vadd.f32 %v545, 1.0
      %v568 = vlog2.pop %v567
      %v569 = vmul.f32 %v568, 0.6931472
      %v570 = vmul.f32 -0.5, %v545
      %v571 = vadd.f32 %v570, 1.0
      %v572 = vmul.f32 %v571, %v545
      %v573 = vand.u32 2147483647, %v545
      %vm574 = vcmp.lt.f32.partialorder %v573, 0.0004427343
      %v575 = vsel %vm574, %v572, %v569
      %v576 = vadd.f32 %v547, 1.0
      %v577 = vlog2.pop %v576
      %v578 = vmul.f32 %v577, 0.6931472
      %v579 = vmul.f32 -0.5, %v547
      %v580 = vadd.f32 %v579, 1.0
      %v581 = vmul.f32 %v580, %v547
      %v582 = vand.u32 2147483647, %v547
      %vm583 = vcmp.lt.f32.partialorder %v582, 0.0004427343
      %v584 = vsel %vm583, %v581, %v578
      %v585 = vadd.f32 %v549, 1.0
      %v586 = vlog2.pop %v585
      %v587 = vmul.f32 %v586, 0.6931472
      %v588 = vmul.f32 -0.5, %v549
      %v589 = vadd.f32 %v588, 1.0
      %v590 = vmul.f32 %v589, %v549
      %v591 = vand.u32 2147483647, %v549
      %vm592 = vcmp.lt.f32.partialorder %v591, 0.0004427343
      %v593 = vsel %vm592, %v590, %v587
      %v594 = vadd.f32 %v551, 1.0
      %v595 = vlog2.pop %v594
      %v596 = vmul.f32 %v595, 0.6931472
      %v597 = vmul.f32 -0.5, %v551
      %v598 = vadd.f32 %v597, 1.0
      %v599 = vmul.f32 %v598, %v551
      %v600 = vand.u32 2147483647, %v551
      %vm601 = vcmp.lt.f32.partialorder %v600, 0.0004427343
      %v602 = vsel %vm601, %v599, %v596
      %v603 = vadd.f32 %v553, 1.0
      %v604 = vlog2.pop %v603
      %v605 = vmul.f32 %v604, 0.6931472
      %v606 = vmul.f32 -0.5, %v553
      %v607 = vadd.f32 %v606, 1.0
      %v608 = vmul.f32 %v607, %v553
      %v609 = vand.u32 2147483647, %v553
      %vm610 = vcmp.lt.f32.partialorder %v609, 0.0004427343
      %v611 = vsel %vm610, %v608, %v605
      %v612 = vadd.f32 %v555, 1.0
      %v613 = vlog2.pop %v612
      %v614 = vmul.f32 %v613, 0.6931472
      %v615 = vmul.f32 -0.5, %v555
      %v616 = vadd.f32 %v615, 1.0
      %v617 = vmul.f32 %v616, %v555
      %v618 = vand.u32 2147483647, %v555
      %vm619 = vcmp.lt.f32.partialorder %v618, 0.0004427343
      %v620 = vsel %vm619, %v617, %v614
      %v621 = vadd.f32 %v557, 1.0
      %v622 = vlog2.pop %v621
      %v623 = vmul.f32 %v622, 0.6931472
      %v624 = vmul.f32 -0.5, %v557
      %v625 = vadd.f32 %v624, 1.0
      %v626 = vmul.f32 %v625, %v557
      %v627 = vand.u32 2147483647, %v557
      %vm628 = vcmp.lt.f32.partialorder %v627, 0.0004427343
      %v629 = vsel %vm628, %v626, %v623
      %v630 = vadd.f32 %v502, %v566
      %v631 = vadd.f32 %v503, %v575
      %v632 = vadd.f32 %v504, %v584
      %v633 = vadd.f32 %v505, %v593
      %v634 = vadd.f32 %v506, %v602
      %v635 = vadd.f32 %v507, %v611
      %v636 = vadd.f32 %v508, %v620
      %v637 = vadd.f32 %v509, %v629
      %v638 = vsel %vm510, %v518, %v630
      %v639 = vsel %vm511, %v519, %v631
      %v640 = vsel %vm512, %v520, %v632
      %v641 = vsel %vm513, %v521, %v633
      %v642 = vsel %vm514, %v522, %v634
      %v643 = vsel %vm515, %v523, %v635
      %v644 = vsel %vm516, %v524, %v636
      %v645 = vsel %vm517, %v525, %v637
      %v646 = vld [vmem:[%s3] sm:$0xff]
      %v647 = vld [vmem:[%s3 + $0x8] sm:$0xff]
      %v648 = vld [vmem:[%s3 + $0x10] sm:$0xff]
      %v649 = vld [vmem:[%s3 + $0x18] sm:$0xff]
      %v650 = vld [vmem:[%s3 + $0x20] sm:$0xff]
      %v651 = vld [vmem:[%s3 + $0x28] sm:$0xff]
      %v652 = vld [vmem:[%s3 + $0x30] sm:$0xff]
      %v653 = vld [vmem:[%s3 + $0x38] sm:$0xff]
      %v654 = vld [vmem:[%s4] sm:$0x1]
      %v656 = vlaneseq
      %v657 = vshrl.u32 %v656, 7
      %v658 = vsub.s32 0, %v657
      %v659 = vrot.slane %v654, %v658
      %vm661 = vcmask 523264
      %v663 = vsel %vm661, %v638, 0
      %v666 = vsel %vm661, %v639, 0
      %v669 = vsel %vm661, %v640, 0
      %v672 = vsel %vm661, %v641, 0
      %v675 = vsel %vm661, %v642, 0
      %v678 = vsel %vm661, %v643, 0
      %v681 = vsel %vm661, %v644, 0
      %v684 = vsel %vm661, %v645, 0
      %686 = vmatprep.subr.mxu0 0.0
      %687 = vmatpush1.msra.mxu0 %v646
      %688 = vmatprep.subr.mxu0 0.0
      %689 = vmatpush1.msra.mxu0 %v647
      %690 = vmatprep.subr.mxu0 0.0
      %691 = vmatpush1.msra.mxu0 %v648
      %692 = vmatprep.subr.mxu0 0.0
      %693 = vmatpush1.msra.mxu0 %v649
      %694 = vmatprep.subr.mxu0 0.0
      %695 = vmatpush1.msra.mxu0 %v650
      %696 = vmatprep.subr.mxu0 0.0
      %697 = vmatpush1.msra.mxu0 %v651
      %698 = vmatprep.subr.mxu0 0.0
      %699 = vmatpush1.msra.mxu0 %v652
      %700 = vmatprep.subr.mxu0 0.0
      %701 = vmatpush1.msra.mxu0 %v653
      %702 = vmatprep.subr.mxu0 0.0
      %703 = vmatpush1.msra.mxu0 0.0
      %704 = vmatprep.subr.mxu0 0.0
      %705 = vmatpush1.msra.mxu0 0.0
      %706 = vmatprep.subr.mxu0 0.0
      %707 = vmatpush1.msra.mxu0 0.0
      %708 = vmatprep.subr.mxu0 0.0
      %709 = vmatpush1.msra.mxu0 0.0
      %710 = vmatprep.subr.mxu0 0.0
      %711 = vmatpush1.msra.mxu0 0.0
      %712 = vmatprep.subr.mxu0 0.0
      %713 = vmatpush1.msra.mxu0 0.0
      %714 = vmatprep.subr.mxu0 0.0
      %715 = vmatpush1.msra.mxu0 0.0
      %716 = vmatprep.subr.mxu0 0.0
      %717 = vmatpush1.msra.mxu0 0.0
      %718 = vmatprep.subr.mxu0 0.0
      %719 = vmatpush1.msra.mxu0 0.0
      %720 = vmatprep.subr.mxu0 0.0
      %721 = vmatpush1.msra.mxu0 0.0
      %722 = vmatprep.subr.mxu0 0.0
      %723 = vmatpush1.msra.mxu0 0.0
      %724 = vmatprep.subr.mxu0 0.0
      %725 = vmatpush1.msra.mxu0 0.0
      %726 = vmatprep.subr.mxu0 0.0
      %727 = vmatpush1.msra.mxu0 0.0
      %728 = vmatprep.subr.mxu0 0.0
      %729 = vmatpush1.msra.mxu0 0.0
      %730 = vmatprep.subr.mxu0 0.0
      %731 = vmatpush1.msra.mxu0 0.0
      %732 = vmatprep.subr.mxu0 0.0
      %733 = vmatpush1.msra.mxu0 0.0
      %734 = vmatprep.subr.mxu0 0.0
      %735 = vmatpush1.msra.mxu0 0.0
      %736 = vmatprep.subr.mxu0 0.0
      %737 = vmatpush1.msra.mxu0 0.0
      %738 = vmatprep.subr.mxu0 0.0
      %739 = vmatpush1.msra.mxu0 0.0
      %740 = vmatprep.subr.mxu0 0.0
      %741 = vmatpush1.msra.mxu0 0.0
      %742 = vmatprep.subr.mxu0 0.0
      %743 = vmatpush1.msra.mxu0 0.0
      %744 = vmatprep.subr.mxu0 0.0
      %745 = vmatpush1.msra.mxu0 0.0
      %746 = vmatprep.subr.mxu0 0.0
      %747 = vmatpush1.msra.mxu0 0.0
      %748 = vmatprep.subr.mxu0 0.0
      %749 = vmatpush1.msra.mxu0 0.0
      %750 = vmatprep.mubr.f32.mxu0 0.0
      %751 = vmatmul.mubr.f32.gmra.mrb[0].mxu0 %v663
      %v752 = vpop.f32.mrb[0].mxu0
      %v753 = vadd.f32 %v659, %v752
      %v754 = vpop.f32.mrb[0].mxu0
      %755 = vmatprep.mubr.f32.mxu0 0.0
      %756 = vmatmul.mubr.f32.gmra.mrb[0].mxu0 %v666
      %v757 = vpop.f32.mrb[0].mxu0
      %v758 = vadd.f32 %v659, %v757
      %v759 = vpop.f32.mrb[0].mxu0
      %760 = vmatprep.mubr.f32.mxu0 0.0
      %761 = vmatmul.mubr.f32.gmra.mrb[0].mxu0 %v669
      %v762 = vpop.f32.mrb[0].mxu0
      %v763 = vadd.f32 %v659, %v762
      %v764 = vpop.f32.mrb[0].mxu0
      %765 = vmatprep.mubr.f32.mxu0 0.0
      %766 = vmatmul.mubr.f32.gmra.mrb[0].mxu0 %v672
      %v767 = vpop.f32.mrb[0].mxu0
      %v768 = vadd.f32 %v659, %v767
      %v769 = vpop.f32.mrb[0].mxu0
      %770 = vmatprep.mubr.f32.mxu0 0.0
      %771 = vmatmul.mubr.f32.gmra.mrb[0].mxu0 %v675
      %v772 = vpop.f32.mrb[0].mxu0
      %v773 = vadd.f32 %v659, %v772
      %v774 = vpop.f32.mrb[0].mxu0
      %775 = vmatprep.mubr.f32.mxu0 0.0
      %776 = vmatmul.mubr.f32.gmra.mrb[0].mxu0 %v678
      %v777 = vpop.f32.mrb[0].mxu0
      %v778 = vadd.f32 %v659, %v777
      %v779 = vpop.f32.mrb[0].mxu0
      %780 = vmatprep.mubr.f32.mxu0 0.0
      %781 = vmatmul.mubr.f32.gmra.mrb[0].mxu0 %v681
      %v782 = vpop.f32.mrb[0].mxu0
      %v783 = vadd.f32 %v659, %v782
      %v784 = vpop.f32.mrb[0].mxu0
      %785 = vmatprep.mubr.f32.mxu0 0.0
      %786 = vmatmul.mubr.f32.gmra.mrb[0].mxu0 %v684
      %v787 = vpop.f32.mrb[0].mxu0
      %v788 = vadd.f32 %v659, %v787
      %v789 = vpop.f32.mrb[0].mxu0
      %790 = vdwg.mxu0
      %v791 = vsub.f32 0.0, %v753
      %v792 = vsub.f32 0.0, %v758
      %v793 = vsub.f32 0.0, %v763
      %v794 = vsub.f32 0.0, %v768
      %v795 = vsub.f32 0.0, %v773
      %v796 = vsub.f32 0.0, %v778
      %v797 = vsub.f32 0.0, %v783
      %v798 = vsub.f32 0.0, %v788
      %v799 = vmul.f32 %v791, 1.442695
      %v800 = vpow.pop %v799
      %v801 = vmul.f32 %v792, 1.442695
      %v802 = vpow.pop %v801
      %v803 = vmul.f32 %v793, 1.442695
      %v804 = vpow.pop %v803
      %v805 = vmul.f32 %v794, 1.442695
      %v806 = vpow.pop %v805
      %v807 = vmul.f32 %v795, 1.442695
      %v808 = vpow.pop %v807
      %v809 = vmul.f32 %v796, 1.442695
      %v810 = vpow.pop %v809
      %v811 = vmul.f32 %v797, 1.442695
      %v812 = vpow.pop %v811
      %v813 = vmul.f32 %v798, 1.442695
      %v814 = vpow.pop %v813
      %v815 = vadd.f32 %v800, 1.0
      %v816 = vadd.f32 %v802, 1.0
      %v817 = vadd.f32 %v804, 1.0
      %v818 = vadd.f32 %v806, 1.0
      %v819 = vadd.f32 %v808, 1.0
      %v820 = vadd.f32 %v810, 1.0
      %v821 = vadd.f32 %v812, 1.0
      %v822 = vadd.f32 %v814, 1.0
      %v823 = vrcp.pop %v815
      %v824 = vmul.f32 1.0, %v823
      %v825 = vrcp.pop %v816
      %v826 = vmul.f32 1.0, %v825
      %v827 = vrcp.pop %v817
      %v828 = vmul.f32 1.0, %v827
      %v829 = vrcp.pop %v818
      %v830 = vmul.f32 1.0, %v829
      %v831 = vrcp.pop %v819
      %v832 = vmul.f32 1.0, %v831
      %v833 = vrcp.pop %v820
      %v834 = vmul.f32 1.0, %v833
      %v835 = vrcp.pop %v821
      %v836 = vmul.f32 1.0, %v835
      %v837 = vrcp.pop %v822
      %v838 = vmul.f32 1.0, %v837
      %v839 = vmul.f32 %v824, 1.002
      %v840 = vmul.f32 %v826, 1.002
      %v841 = vmul.f32 %v828, 1.002
      %v842 = vmul.f32 %v830, 1.002
      %v843 = vmul.f32 %v832, 1.002
      %v844 = vmul.f32 %v834, 1.002
      %v845 = vmul.f32 %v836, 1.002
      %v846 = vmul.f32 %v838, 1.002
      %v847 = vsub.f32 %v839, 0.001
      %v848 = vsub.f32 %v840, 0.001
      %v849 = vsub.f32 %v841, 0.001
      %v850 = vsub.f32 %v842, 0.001
      %v851 = vsub.f32 %v843, 0.001
      %v852 = vsub.f32 %v844, 0.001
      %v853 = vsub.f32 %v845, 0.001
      %v854 = vsub.f32 %v846, 0.001
      %v855 = vlaneseq
      %v856 = vand.u32 %v855, 127
      %vm857 = vcmp.eq.s32.totalorder %v856, 0
      %v858 = vsel %vm857, %v753, %v847
      %v859 = vsel %vm857, %v758, %v848
      %v860 = vsel %vm857, %v763, %v849
      %v861 = vsel %vm857, %v768, %v850
      %v862 = vsel %vm857, %v773, %v851
      %v863 = vsel %vm857, %v778, %v852
      %v864 = vsel %vm857, %v783, %v853
      %v865 = vsel %vm857, %v788, %v854
      %vm866 = vcmask 31744
      %867 = vst.msk [vmem:[%s262] sm:$0xff] %vm866, %v858
      %868 = vst.msk [vmem:[%s262 + $0x8] sm:$0xff] %vm866, %v859
      %869 = vst.msk [vmem:[%s262 + $0x10] sm:$0xff] %vm866, %v860
      %870 = vst.msk [vmem:[%s262 + $0x18] sm:$0xff] %vm866, %v861
      %871 = vst.msk [vmem:[%s262 + $0x20] sm:$0xff] %vm866, %v862
      %872 = vst.msk [vmem:[%s262 + $0x28] sm:$0xff] %vm866, %v863
      %873 = vst.msk [vmem:[%s262 + $0x30] sm:$0xff] %vm866, %v864
      %874 = vst.msk [vmem:[%s262 + $0x38] sm:$0xff] %vm866, %v865
      %s875 = smul.u32 8, %s21
      %p876 = scmp.lt.s32.totalorder %s20, 1
      %s877 = scalar_select %p876, %s20, 1
      %p878 = scmp.lt.s32.totalorder %s875, 7
      %s879 = scalar_select %p878, %s875, 7
      %s880 = smul.addr %s877, 8
      %s881 = sadd.s32 %s879, %s880
      %s882 = smul.addr %s881, 8
      %s883 = scalar_lea.vmem %s5, %s882
      // Predicated region
      $region41: #{tpu_custom_call.1} parent=39 // pred_check
        %p884 = pneg %p160
      $region42: #{tpu_custom_call.1} parent=39 // pred_check_branch
        %886 = sbr.rel (%p884) target = $region44
      $region43: #{tpu_custom_call.1} parent=39 // pred_region
        %s887 = smul.u32 8, %s21
      $region44: #{tpu_custom_call.1} parent=39 // pred_fallthru
        _
    $region40: #{tpu_custom_call.1} parent=5 // pred_fallthru
      _
    %p888 = scmp.le.s32.totalorder 2, %s11
    // Predicated region
    $region45: #{tpu_custom_call.1} parent=5 // pred_check
      %p889 = pneg %p888
    $region46: #{tpu_custom_call.1} parent=5 // pred_check_branch
      %891 = sbr.rel (%p889) target = $region48
    $region47: #{tpu_custom_call.1} parent=5 // pred_region
      %s892 = ssub.s32 %s11, 2
      // Predicated region
      $region49: #{tpu_custom_call.1} parent=47 // pred_check
        %p893 = pneg %p166
      $region50: #{tpu_custom_call.1} parent=47 // pred_check_branch
        %895 = sbr.rel (%p893) target = $region52
      $region51: #{tpu_custom_call.1} parent=47 // pred_region
        %s896 = smul.u32 8, %s23
        %p897 = scmp.lt.s32.totalorder %s22, 1
        %s898 = scalar_select %p897, %s22, 1
        %p899 = scmp.lt.s32.totalorder %s896, 7
        %s900 = scalar_select %p899, %s896, 7
        %s901 = smul.addr %s898, 8
        %s902 = sadd.s32 %s900, %s901
        %s903 = smul.addr %s902, 8
        %s904 = scalar_lea.vmem %s5, %s903
      $region52: #{tpu_custom_call.1} parent=47 // pred_fallthru
        _
    $region48: #{tpu_custom_call.1} parent=5 // pred_fallthru
      _
  $region6: #{tpu_custom_call.1} parent=0 // loop_footer
    %s15 = sadd.s32 1, %s11
  $region7: #{tpu_custom_call.1} parent=0 // loop_footer_branch
    %10 = sbr.rel target = $region3
  $region8: #{tpu_custom_call.1} parent=0 // loop_exit
    _

</llo_original>
